<compile_context>
chip_gen: v7x
topology: tpu7x:2x2x1
jax: 0.10.0
libtpu: 0.0.40
codegen_flags: <defaults>
</compile_context>

<pallas_src>
import jax
import jax.numpy as jnp
from jax import lax
from jax.experimental import pallas as pl
from jax.experimental.pallas import tpu as pltpu

_TN_DIMS = (((0,), (0,)), ((), ()))     # contract axis 0 of both: A^T @ M
_NT_DIMS = (((1,), (1,)), ((), ()))     # q @ k^T without materializing k.T

_VMEM_LIMIT_CACHE = None


def _vmem_limit_bytes():
    """Generation-aware scoped-VMEM limit: ~3/4 of physical VMEM per core."""
    global _VMEM_LIMIT_CACHE
    if _VMEM_LIMIT_CACHE is None:
        cap = 128 * 1024 * 1024
        try:
            info = pltpu.get_tpu_info()
            cap = int(getattr(info, "vmem_capacity_bytes", cap) or cap)
        except Exception:
            pass
        _VMEM_LIMIT_CACHE = (cap * 3) // 4    # ~48 MiB v7x, ~96 MiB v5e/v6e
    return _VMEM_LIMIT_CACHE


def _batchnorm_relu(h):
    # training-mode BatchNorm1d (affine = identity), eps = 1e-5, then ReLU.
    mean = jnp.mean(h, axis=0, keepdims=True)
    var = jnp.mean((h - mean) ** 2, axis=0, keepdims=True)
    h = (h - mean) * lax.rsqrt(var + 1e-5)
    return jnp.maximum(h, 0.0)


# ----------------------------------------------------------------------------
# Kernel 1: per-relation relational graph conv  (relationalGraphStack layer)
#   out[r] = relu(batchnorm(A_r^T @ X @ W_r + b_r))
# ----------------------------------------------------------------------------
def _make_rel_conv_kernel(xw_first):
    def kernel(a_ref, x_ref, w_ref, b_ref, o_ref):
        a = a_ref[0]                                    # (N_in, N_out) bf16
        x = x_ref[...].astype(jnp.bfloat16)             # (N_in, Din)
        w = w_ref[0].astype(jnp.bfloat16)               # (Din, Dout)
        b = b_ref[0]                                    # (1, Dout) f32
        if xw_first:   # Dout < Din: contract the N^2 term against Dout.
            xw = jnp.dot(x, w, preferred_element_type=jnp.float32)
            h = lax.dot_general(a, xw.astype(jnp.bfloat16), _TN_DIMS,
                                preferred_element_type=jnp.float32) + b
        else:          # Din <= Dout: contract the N^2 term against Din.
            msg = lax.dot_general(a, x, _TN_DIMS,
                                  preferred_element_type=jnp.float32)
            h = jnp.dot(msg.astype(jnp.bfloat16), w,
                        preferred_element_type=jnp.float32) + b
        o_ref[0] = _batchnorm_relu(h)

    return kernel


def relational_graph_conv(adj_rnn, x, w, b):
    # TODO(synk): for large N on v7x, tile over output rows (grid=(R, N/256))
    # with two-pass BN stats; also lane-pack W over relations (X @ W_all of
    # shape (Din, R*Dout)) to fill the 256-wide MXU when Dout < 128.
    r, n, _ = adj_rnn.shape
    din = x.shape[1]
    dout = w.shape[-1]
    kernel = _make_rel_conv_kernel(xw_first=(dout < din))
    return pl.pallas_call(
        kernel,
        out_shape=jax.ShapeDtypeStruct((r, n, dout), jnp.float32),
        grid=(r,),
        in_specs=[
            pl.BlockSpec((1, n, n), lambda i: (i, 0, 0)),
            pl.BlockSpec((n, din), lambda i: (0, 0)),
            pl.BlockSpec((1, din, dout), lambda i: (i, 0, 0)),
            pl.BlockSpec((1, 1, dout), lambda i: (i, 0, 0)),
        ],
        out_specs=pl.BlockSpec((1, n, dout), lambda i: (i, 0, 0)),
        compiler_params=pltpu.CompilerParams(
            dimension_semantics=("parallel",),
            vmem_limit_bytes=_vmem_limit_bytes()),
    )(adj_rnn, x, w, b)


# ----------------------------------------------------------------------------
# Kernel 2: rewiring attention score layer (Rewirescorelayer)
#   per attention relation r:  mean_h softmax( (X Wq)_h (X Wk)_h^T / sqrt(dh) )
# ----------------------------------------------------------------------------
def _make_attn_kernel(num_heads, head_dim):
    scale = 1.0 / float(head_dim) ** 0.5
    inv_heads = 1.0 / float(num_heads)

    def kernel(x_ref, wq_ref, wk_ref, o_ref):
        x = x_ref[0].astype(jnp.bfloat16)               # (N, d) bf16
        n = x.shape[0]
        # Full-lane-width projections hoisted out of the head loop (one MXU
        # pass each instead of num_heads narrow ones).
        q = jnp.dot(x, wq_ref[...].astype(jnp.bfloat16),
                    preferred_element_type=jnp.float32)  # (N, H*dh) f32
        k = jnp.dot(x, wk_ref[...].astype(jnp.bfloat16),
                    preferred_element_type=jnp.float32)  # (N, H*dh) f32
        acc = jnp.zeros((n, n), jnp.float32)
        for h in range(num_heads):
            lo = h * head_dim
            qh = q[:, lo:lo + head_dim].astype(jnp.bfloat16)
            kh = k[:, lo:lo + head_dim].astype(jnp.bfloat16)
            s = lax.dot_general(qh, kh, _NT_DIMS,
                                preferred_element_type=jnp.float32) * scale
            s = s - jnp.max(s, axis=-1, keepdims=True)
            p = jnp.exp(s)
            denom = jnp.sum(p, axis=-1, keepdims=True)
            # 1/num_heads folded into the (N,1) reciprocal (EUP), not an extra
            # (N,N) VPU multiply at the end.
            acc = acc + p * (pl.reciprocal(denom, approx=True) * inv_heads)
        o_ref[0] = acc.astype(o_ref.dtype)

    return kernel


def rewire_score_layer(relational_output, wq, wk, space_num, attn_r,
                       num_heads, head_dim):
    # TODO(synk): for large N (esp. v7x 64 MiB VMEM), tile over query rows with
    # flash-style online softmax instead of a fully resident (N, N) block.
    _, n, d = relational_output.shape
    kernel = _make_attn_kernel(num_heads, head_dim)
    return pl.pallas_call(
        kernel,
        out_shape=jax.ShapeDtypeStruct((attn_r, n, n), jnp.bfloat16),
        grid=(attn_r,),
        in_specs=[
            # attn_input = relational_output[space_num:, :, :] (index-mapped,
            # never materialized in the wrapper)
            pl.BlockSpec((1, n, d), lambda i: (i + space_num, 0, 0)),
            pl.BlockSpec((d, wq.shape[1]), lambda i: (0, 0)),
            pl.BlockSpec((d, wk.shape[1]), lambda i: (0, 0)),
        ],
        out_specs=pl.BlockSpec((1, n, n), lambda i: (i, 0, 0)),
        compiler_params=pltpu.CompilerParams(
            dimension_semantics=("parallel",),
            vmem_limit_bytes=_vmem_limit_bytes()),
    )(relational_output, wq, wk)


# ----------------------------------------------------------------------------
# Kernel 3 (fused): rewiring max + new_edge_list emission + rewireGearNetstack
#                   conv + SumReadout, in one pass over the relations.
#
#   column block i of new_edge_list:
#       i <  attn_R : max(adjacency[relation space+i], attention[i])
#       i >= attn_R : adjacency[relation i-attn_R]
#   hidden = relu(batchnorm( sum_i E_i^T X W_i + X W_self + b ))
#   graph_feature = sum_nodes(hidden)
# ----------------------------------------------------------------------------
def _make_fused_gear_kernel(attn_r, xw_first):
    def kernel(adj_ref, attn_ref, x_ref, w_ref, ws_ref, b_ref,
               hid_ref, gf_ref, edge_ref, acc_ref):
        r = pl.program_id(0)

        @pl.when(r == 0)
        def _():
            acc_ref[...] = jnp.zeros_like(acc_ref)

        x = x_ref[...].astype(jnp.bfloat16)               # (N_in, Din)
        w = w_ref[0].astype(jnp.bfloat16)                 # (Din, Dout)
        if xw_first:   # Dout < Din: contract N^2 term against Dout.
            xw = jnp.dot(x, w,
                         preferred_element_type=jnp.float32).astype(jnp.bfloat16)

        def do_relation(eff):
            # eff: (N_in, N_out) bf16 local value -- written once to the
            # lane-dense new_edge_list block and fed straight to the MXU
            # (no transpose, no re-read of the output buffer).
            edge_ref[...] = eff.astype(jnp.float32)
            if xw_first:
                acc_ref[...] += lax.dot_general(
                    eff, xw, _TN_DIMS, preferred_element_type=jnp.float32)
            else:
                msg = lax.dot_general(eff, x, _TN_DIMS,
                                      preferred_element_type=jnp.float32)
                acc_ref[...] += jnp.dot(msg.astype(jnp.bfloat16), w,
                                        preferred_element_type=jnp.float32)

        @pl.when(r < attn_r)
        def _():
            do_relation(jnp.maximum(adj_ref[0], attn_ref[0]))

        @pl.when(r >= attn_r)
        def _():
            do_relation(adj_ref[0])

        @pl.when(r == pl.num_programs(0) - 1)
        def _():
            h = (acc_ref[...]
                 + jnp.dot(x, ws_ref[...].astype(jnp.bfloat16),
                           preferred_element_type=jnp.float32)
                 + b_ref[...])
            h = _batchnorm_relu(h)
            hid_ref[...] = h
            gf_ref[...] = jnp.sum(h, axis=0, keepdims=True)   # fused SumReadout

    return kernel


def rewired_gearnet_conv(adj_rnn, attn_rnn, x, w, w_self, b, space_num, attn_r):
    # TODO(synk): for v7x (2 TCs, 64 MiB VMEM) add a leading parallel grid axis
    # over N_out tiles with per-tile accumulators and a tiny epilogue pass that
    # applies BN/ReLU + readout with *global* node statistics.
    num_rel, n, _ = adj_rnn.shape
    din = x.shape[1]
    dout = w.shape[-1]
    kernel = _make_fused_gear_kernel(attn_r, xw_first=(dout < din))
    return pl.pallas_call(
        kernel,
        out_shape=(
            jax.ShapeDtypeStruct((n, dout), jnp.float32),          # hidden
            jax.ShapeDtypeStruct((1, dout), jnp.float32),          # graph feat
            jax.ShapeDtypeStruct((n, num_rel * n), jnp.float32),   # new_edge_list
        ),
        grid=(num_rel,),
        in_specs=[
            # adjacency in the *rewired* (concatenated) relation order:
            #   grid step i <  attn_r -> original relation space + i
            #   grid step i >= attn_r -> original relation i - attn_r
            pl.BlockSpec((1, n, n), lambda i: ((i + space_num) % num_rel, 0, 0)),
            # clamp: block index stays constant for i >= attn_r, so the unused
            # attention block is never re-DMA'd on the non-attention steps.
            pl.BlockSpec((1, n, n), lambda i: (jnp.minimum(i, attn_r - 1), 0, 0)),
            pl.BlockSpec((n, din), lambda i: (0, 0)),
            pl.BlockSpec((1, din, dout), lambda i: (i, 0, 0)),
            pl.BlockSpec((din, dout), lambda i: (0, 0)),
            pl.BlockSpec((1, dout), lambda i: (0, 0)),
        ],
        out_specs=[
            pl.BlockSpec((n, dout), lambda i: (0, 0)),
            pl.BlockSpec((1, dout), lambda i: (0, 0)),
            pl.BlockSpec((n, n), lambda i: (0, i)),
        ],
        scratch_shapes=[pltpu.VMEM((n, dout), jnp.float32)],
        compiler_params=pltpu.CompilerParams(
            dimension_semantics=("arbitrary",),
            vmem_limit_bytes=_vmem_limit_bytes()),
    )(adj_rnn, attn_rnn, x, w, w_self, b)


# ----------------------------------------------------------------------------
# Model wrapper (glue in plain JAX)
# ----------------------------------------------------------------------------
class DGMGearnetOnlySequence:
    """JAX/Pallas port of DGMGearnet_only_sequence (single stack layer,
    concat_hidden=False, short_cut=False, module-level batch_norm=False,
    num_angle_bin=None, readout='sum').  num_node must be a multiple of 128
    for the lane-dense new_edge_list output blocks.

    Precision note: adjacency / attention scores travel through HBM as bf16
    and all MXU operands are bf16 with f32 accumulation (~1e-3 vs f32 torch)."""

    def __init__(self, *, input_dim, relation_out_dim, diffusion_out_dim,
                 num_relation, attn_num_relation, num_heads, score_out_dim,
                 key):
        self.num_relation = num_relation
        self.attn_num_relation = attn_num_relation
        self.space_information_num = num_relation - attn_num_relation
        self.num_heads = num_heads
        self.head_dim = score_out_dim // num_heads
        self.output_dim = diffusion_out_dim

        ks = jax.random.split(key, 6)
        s = 0.1
        # relationalGraphStack parameters (per-relation linear).
        self.w_rel = s * jax.random.normal(
            ks[0], (num_relation, input_dim, relation_out_dim), jnp.float32)
        self.b_rel = s * jax.random.normal(
            ks[1], (num_relation, 1, relation_out_dim), jnp.float32)
        # Rewirescorelayer parameters.
        self.wq = s * jax.random.normal(
            ks[2], (relation_out_dim, score_out_dim), jnp.float32)
        self.wk = s * jax.random.normal(
            ks[3], (relation_out_dim, score_out_dim), jnp.float32)
        # rewireGearNetstack parameters.
        self.w_gear = s * jax.random.normal(
            ks[4], (num_relation, input_dim, diffusion_out_dim), jnp.float32)
        self.w_self = s * jax.random.normal(
            ks[5], (input_dim, diffusion_out_dim), jnp.float32)
        self.b_gear = jnp.zeros((1, diffusion_out_dim), jnp.float32)

    def __call__(self, node_feat, edge_list, edge_weight, num_node):
        N = num_node
        R = self.num_relation
        space = self.space_information_num
        attn_r = self.attn_num_relation

        node_in, node_out, relation = (edge_list[:, 0], edge_list[:, 1],
                                       edge_list[:, 2])
        # Dense per-relation adjacency (R, N_in, N_out): adjacency[r, in, out].
        # Scatter-add in f32, stored in bf16 (both consumers feed it to the MXU
        # as bf16; halves the dominant HBM traffic).
        # TODO(synk): for genuinely sparse protein graphs, replace the dense
        # O(R*N^2) adjacency with CSR offsets + scalar-prefetched gather.
        adj_rnn = jnp.zeros((R, N, N), jnp.float32).at[
            relation, node_in, node_out].add(edge_weight).astype(jnp.bfloat16)

        # --- score_layers[0]: relationalGraphStack --------------------------
        relational_output = relational_graph_conv(
            adj_rnn, node_feat, self.w_rel, self.b_rel)        # (R, N, d1) f32

        # --- score_layers[1]: Rewirescorelayer on the attention relations ---
        attn_rnn = rewire_score_layer(
            relational_output, self.wq, self.wk, space, attn_r,
            self.num_heads, self.head_dim)                     # (attn_R, N, N) bf16

        # --- fused: max / concat / rewireGearNetstack / SumReadout ----------
        hidden, graph_feature, new_edge_list = rewired_gearnet_conv(
            adj_rnn, attn_rnn, node_feat, self.w_gear, self.w_self,
            self.b_gear, space, attn_r)

        return {"graph_feature": graph_feature,
                "node_feature": hidden,
                "edge_list": new_edge_list}


if __name__ == "__main__":
    # Small deterministic problem (N a multiple of 128 for lane-dense blocks).
    N = 128                # num_node
    R = 3                  # num_relation
    ATTN_R = 2             # attn_num_relation
    D_IN = 16              # input node feature dim
    D_REL = 8              # relation_dims[0][-1]  (= score_in_dim)
    D_SCORE = 8            # score_out_dim  (num_heads=2 -> head_dim=4)
    D_OUT = 32             # diffusion_dims[0][-1]
    NUM_EDGES = 512

    key = jax.random.PRNGKey(0)
    k_in, k_out, k_rel, k_feat, k_param = jax.random.split(key, 5)

    node_in = jax.random.randint(k_in, (NUM_EDGES,), 0, N)
    node_out = jax.random.randint(k_out, (NUM_EDGES,), 0, N)
    relation = jax.random.randint(k_rel, (NUM_EDGES,), 0, R)
    edge_list = jnp.stack([node_in, node_out, relation], axis=1)
    edge_weight = jnp.ones((NUM_EDGES,), jnp.float32)
    node_feat = jax.random.normal(k_feat, (N, D_IN), jnp.float32)

    model = DGMGearnetOnlySequence(
        input_dim=D_IN, relation_out_dim=D_REL, diffusion_out_dim=D_OUT,
        num_relation=R, attn_num_relation=ATTN_R, num_heads=2,
        score_out_dim=D_SCORE, key=k_param)

    out = model(node_feat, edge_list, edge_weight, N)
    jax.block_until_ready(out["graph_feature"])
    jax.block_until_ready(out["node_feature"])
    jax.block_until_ready(out["edge_list"])

    assert out["graph_feature"].shape == (1, D_OUT)
    assert out["node_feature"].shape == (N, D_OUT)
    assert out["edge_list"].shape == (N, R * N)
    assert bool(jnp.all(jnp.isfinite(out["node_feature"])))
    print("KERNEL_OK")
</pallas_src>

<mosaic_0001>
module attributes {stable_mosaic.version = 11 : i64} {
  func.func @kernel(%arg0: i32, %arg1: memref<1x128x128xbf16, #tpu.memory_space<vmem>>, %arg2: memref<128x16xf32, #tpu.memory_space<vmem>>, %arg3: memref<1x16x8xf32, #tpu.memory_space<vmem>>, %arg4: memref<1x1x8xf32, #tpu.memory_space<vmem>>, %arg5: memref<1x128x8xf32, #tpu.memory_space<vmem>>) attributes {dimension_semantics = [#tpu.dimension_semantics<parallel>], iteration_bounds = array<i64: 3>, scalar_prefetch = 0 : i64, scratch_operands = 0 : i64, tpu.core_type = #tpu.core_type<tc>, window_params = [{transform_indices = @transform_0, window_bounds = array<i64: 1, 128, 128>}, {pipeline_mode = #tpu.pipeline_mode<synchronous>, transform_indices = @transform_1, window_bounds = array<i64: 128, 16>}, {transform_indices = @transform_2, window_bounds = array<i64: 1, 16, 8>}, {transform_indices = @transform_3, window_bounds = array<i64: 1, 1, 8>}, {transform_indices = @transform_4, window_bounds = array<i64: 1, 128, 8>}]} {
    %c0 = arith.constant 0 : index
    %c0_0 = arith.constant 0 : index
    %c0_1 = arith.constant 0 : index
    %0 = vector.load %arg1[%c0, %c0_0, %c0_1] : memref<1x128x128xbf16, #tpu.memory_space<vmem>>, vector<1x128x128xbf16>
    %1 = vector.shape_cast %0 : vector<1x128x128xbf16> to vector<128x128xbf16>
    %c0_2 = arith.constant 0 : index
    %c0_3 = arith.constant 0 : index
    %2 = vector.load %arg2[%c0_2, %c0_3] : memref<128x16xf32, #tpu.memory_space<vmem>>, vector<128x16xf32>
    %3 = arith.truncf %2 : vector<128x16xf32> to vector<128x16xbf16>
    %c0_4 = arith.constant 0 : index
    %c0_5 = arith.constant 0 : index
    %c0_6 = arith.constant 0 : index
    %4 = vector.load %arg3[%c0_4, %c0_5, %c0_6] : memref<1x16x8xf32, #tpu.memory_space<vmem>>, vector<1x16x8xf32>
    %5 = vector.shape_cast %4 : vector<1x16x8xf32> to vector<16x8xf32>
    %6 = arith.truncf %5 : vector<16x8xf32> to vector<16x8xbf16>
    %c0_7 = arith.constant 0 : index
    %c0_8 = arith.constant 0 : index
    %c0_9 = arith.constant 0 : index
    %7 = vector.load %arg4[%c0_7, %c0_8, %c0_9] : memref<1x1x8xf32, #tpu.memory_space<vmem>>, vector<1x1x8xf32>
    %8 = vector.shape_cast %7 : vector<1x1x8xf32> to vector<1x8xf32>
    %cst = arith.constant dense<0.000000e+00> : vector<128x8xf32>
    %9 = tpu.matmul %3, %6, %cst {dimension_numbers = #tpu.dot_dimension_numbers<[1], [0], [0], [1], [0, 0, 1, 1], [], []>} : vector<128x16xbf16>, vector<16x8xbf16>, vector<128x8xf32> -> vector<128x8xf32>
    %10 = arith.truncf %9 : vector<128x8xf32> to vector<128x8xbf16>
    %cst_10 = arith.constant dense<0.000000e+00> : vector<128x8xf32>
    %11 = tpu.matmul %1, %10, %cst_10 {dimension_numbers = #tpu.dot_dimension_numbers<[0], [0], [1], [1], [0, 1, 1, 1], [], []>} : vector<128x128xbf16>, vector<128x8xbf16>, vector<128x8xf32> -> vector<128x8xf32>
    %12 = vector.broadcast %8 : vector<1x8xf32> to vector<128x8xf32>
    %13 = arith.addf %11, %12 : vector<128x8xf32>
    %cst_11 = arith.constant dense<0.000000e+00> : vector<8xf32>
    %14 = vector.multi_reduction <add>, %13, %cst_11 [0] : vector<128x8xf32> to vector<8xf32>
    %15 = vector.shape_cast %14 : vector<8xf32> to vector<1x8xf32>
    %cst_12 = arith.constant 1.280000e+02 : f32
    %16 = vector.broadcast %cst_12 : f32 to vector<1x8xf32>
    %17 = arith.divf %15, %16 : vector<1x8xf32>
    %18 = vector.broadcast %17 : vector<1x8xf32> to vector<128x8xf32>
    %19 = arith.subf %13, %18 : vector<128x8xf32>
    %20 = arith.mulf %19, %19 : vector<128x8xf32>
    %cst_13 = arith.constant dense<0.000000e+00> : vector<8xf32>
    %21 = vector.multi_reduction <add>, %20, %cst_13 [0] : vector<128x8xf32> to vector<8xf32>
    %22 = vector.shape_cast %21 : vector<8xf32> to vector<1x8xf32>
    %cst_14 = arith.constant 1.280000e+02 : f32
    %23 = vector.broadcast %cst_14 : f32 to vector<1x8xf32>
    %24 = arith.divf %22, %23 : vector<1x8xf32>
    %25 = vector.broadcast %17 : vector<1x8xf32> to vector<128x8xf32>
    %26 = arith.subf %13, %25 : vector<128x8xf32>
    %cst_15 = arith.constant 9.99999974E-6 : f32
    %27 = vector.broadcast %cst_15 : f32 to vector<1x8xf32>
    %28 = arith.addf %24, %27 : vector<1x8xf32>
    %29 = math.rsqrt %28 : vector<1x8xf32>
    %30 = vector.broadcast %29 : vector<1x8xf32> to vector<128x8xf32>
    %31 = arith.mulf %26, %30 : vector<128x8xf32>
    %cst_16 = arith.constant 0.000000e+00 : f32
    %32 = vector.broadcast %cst_16 : f32 to vector<128x8xf32>
    %33 = arith.maximumf %31, %32 : vector<128x8xf32>
    %c0_17 = arith.constant 0 : index
    %c0_18 = arith.constant 0 : index
    %c0_19 = arith.constant 0 : index
    %34 = vector.load %arg5[%c0_17, %c0_18, %c0_19] : memref<1x128x8xf32, #tpu.memory_space<vmem>>, vector<1x128x8xf32>
    %35 = vector.shape_cast %34 : vector<1x128x8xf32> to vector<128x8xf32>
    %36 = vector.shape_cast %33 : vector<128x8xf32> to vector<1x128x8xf32>
    tpu.vector_store %arg5[%c0_17, %c0_18, %c0_19], %36 {strides = array<i32>} : memref<1x128x8xf32, #tpu.memory_space<vmem>>, vector<1x128x8xf32>,
    return
  }
  func.func @transform_0(%arg0: i32) -> (i32, i32, i32) {
    %c0_i32 = arith.constant 0 : i32
    %c0_i32_0 = arith.constant 0 : i32
    %c0_i32_1 = arith.constant 0 : i32
    return %arg0, %c0_i32, %c0_i32_0 : i32, i32, i32
  }
  func.func @transform_1(%arg0: i32) -> (i32, i32) {
    %c0_i32 = arith.constant 0 : i32
    %c0_i32_0 = arith.constant 0 : i32
    %c0_i32_1 = arith.constant 0 : i32
    return %c0_i32, %c0_i32_0 : i32, i32
  }
  func.func @transform_2(%arg0: i32) -> (i32, i32, i32) {
    %c0_i32 = arith.constant 0 : i32
    %c0_i32_0 = arith.constant 0 : i32
    %c0_i32_1 = arith.constant 0 : i32
    return %arg0, %c0_i32, %c0_i32_0 : i32, i32, i32
  }
  func.func @transform_3(%arg0: i32) -> (i32, i32, i32) {
    %c0_i32 = arith.constant 0 : i32
    %c0_i32_0 = arith.constant 0 : i32
    %c0_i32_1 = arith.constant 0 : i32
    return %arg0, %c0_i32, %c0_i32_0 : i32, i32, i32
  }
  func.func @transform_4(%arg0: i32) -> (i32, i32, i32) {
    %c0_i32 = arith.constant 0 : i32
    %c0_i32_0 = arith.constant 0 : i32
    %c0_i32_1 = arith.constant 0 : i32
    return %arg0, %c0_i32, %c0_i32_0 : i32, i32, i32
  }
}

</mosaic_0001>

<llo_original>
// kernel: tpu_custom_call.1
$region0: #{tpu_custom_call.1}
  #allocation0 [shape = 'u32[]', space=smem, size = 0x4, offset = 0x4, fixed_abs, tag = 'smem constant byte address 0x4 - core index']
  #allocation1 [shape = 'u32[144,128]{1,0:T(1,128)}', space=vmem, size = 0x12000, scoped, tag = 'internal scratch']
  %s0 = inlined_call_operand.hbm [shape: bf16[3,128,128], index: 0, kind: input, shape index: {}]
  %s1 = inlined_call_operand.hbm [shape: f32[128,16], index: 1, kind: input, shape index: {}]
  %s2 = inlined_call_operand.hbm [shape: f32[3,16,8], index: 2, kind: input, shape index: {}]
  %s3 = inlined_call_operand.hbm [shape: f32[3,1,8], index: 3, kind: input, shape index: {}]
  %s4 = inlined_call_operand.hbm [shape: f32[3,128,8], index: 4, kind: output, shape index: {}]
  %s5 = sld [smem:[#allocation0]]
  $region65: #{tpu_custom_call.1} parent=0
    _
  %s7 = ssub.s32 1, %s5
  %s8 = scalar_select 0, %s7, %s5
  $region1: #{tpu_custom_call.1} parent=0
    #allocation2 [shape = 'u8[65536]{0}', space=vmem, size = 0x10000, scoped, tag = 'input window, operand 0']
    #allocation3 [shape = 's32[2]{0}', space=sflag, size = 0x8, scoped, tag = 'scoped memory for tpu_custom_call.1']
    #allocation4 [shape = 's32[2]{0}', space=sflag, size = 0x8, scoped, tag = 'scoped memory for tpu_custom_call.1']
    #allocation5 [shape = 'u8[65536]{0}', space=vmem, size = 0x10000, scoped, tag = 'input window, operand 1, single buffered']
    #allocation6 [shape = 's32[1]{0}', space=sflag, size = 0x4, scoped, tag = 'scoped memory for tpu_custom_call.1']
    #allocation7 [shape = 'u8[16384]{0}', space=vmem, size = 0x4000, scoped, tag = 'input window, operand 2']
    #allocation8 [shape = 'u8[1024]{0}', space=vmem, size = 0x400, scoped, tag = 'input window, operand 3']
    #allocation9 [shape = 'u8[131072]{0}', space=vmem, size = 0x20000, scoped, tag = 'output window, operand 0']
    %9 = vsyncpa [#allocation3], 0
    %s10 = scalar_lea.sflag [#allocation3], 1
    %11 = vsyncpa %s10, 0
    %12 = vsyncpa [#allocation6], 0
    %13 = vsyncpa [#allocation4], 0
    %s14 = scalar_lea.sflag [#allocation4], 1
    %15 = vsyncpa %s14, 0
    loop: start=0, step=1, limit=5
    $region2: #{tpu_custom_call.1} parent=1 // loop_pre_header
      _
    $region3: #{tpu_custom_call.1} parent=1 // loop_header
      %s17 = sphi 0, %s21
      %p18 = scmp.ge.s32.totalorder %s17, 5
      %s27 = sphi 0, %s29
      %s30 = sphi 0, %s27
      %s31 = sphi 0, %s30
      %s47 = sphi 0, %s31
      %s51 = sphi 0, %s51
      %s53 = sphi 0, %s51
      %s54 = sphi 0, %s53
      %s68 = sphi 0, %s54
      %s74 = sphi 0, %s76
      %s77 = sphi 0, %s74
      %s78 = sphi 0, %s77
      %s94 = sphi 0, %s78
      %s100 = sphi 0, %s102
      %s103 = sphi 0, %s100
      %s104 = sphi 0, %s103
      %s120 = sphi 0, %s104
      %s126 = sphi 0, %s128
      %s129 = sphi 0, %s126
      %s130 = sphi 0, %s129
      %s146 = sphi 0, %s130
    $region4: #{tpu_custom_call.1} parent=1 // loop_header_branch
      %20 = sbr.rel (%p18) target = $region8
    $region5: #{tpu_custom_call.1} parent=1 // loop_body
      %s22 = ssub.s32 %s17, 1
      %s23 = ssub.s32 %s17, 2
      %s24 = sadd.s32 %s17, 1
      %s25 = ssub.s32 %s17, %s24
      %p26 = scmp.eq.s32.totalorder %s25, 0
      %s28 = sadd.s32 %s27, 1
      %s29 = scalar_select %p26, %s27, %s28
      %p32 = pneg %p26
      %p33 = scmp.eq.s32.totalorder %s17, 2
      %p34 = por %p32, %p33
      %p35 = scmp.ne.s32.totalorder %s27, %s30
      %p36 = scmp.eq.s32.totalorder %s17, 0
      %p37 = por %p35, %p36
      %p38 = scmp.ne.s32.totalorder %s27, %s30
      %p39 = scmp.eq.s32.totalorder %s22, 2
      %p40 = por %p38, %p39
      %p41 = scmp.ne.s32.totalorder %s30, %s31
      %p42 = scmp.eq.s32.totalorder %s22, 0
      %p43 = por %p41, %p42
      %p44 = scmp.ne.s32.totalorder %s30, %s31
      %p45 = scmp.eq.s32.totalorder %s23, 2
      %p46 = por %p44, %p45
      %p48 = scmp.ne.s32.totalorder %s31, %s47
      %p49 = scmp.eq.s32.totalorder %s23, 0
      %p50 = por %p48, %p49
      %s52 = sadd.s32 %s51, 1
      %p55 = scmp.eq.s32.totalorder %s17, 2
      %p56 = scmp.ne.s32.totalorder %s51, %s53
      %p57 = scmp.eq.s32.totalorder %s17, 0
      %p58 = por %p56, %p57
      %p59 = scmp.ne.s32.totalorder %s51, %s53
      %p60 = scmp.eq.s32.totalorder %s22, 2
      %p61 = por %p59, %p60
      %p62 = scmp.ne.s32.totalorder %s53, %s54
      %p63 = scmp.eq.s32.totalorder %s22, 0
      %p64 = por %p62, %p63
      %p65 = scmp.ne.s32.totalorder %s53, %s54
      %p66 = scmp.eq.s32.totalorder %s23, 2
      %p67 = por %p65, %p66
      %p69 = scmp.ne.s32.totalorder %s54, %s68
      %p70 = scmp.eq.s32.totalorder %s23, 0
      %p71 = por %p69, %p70
      %s72 = ssub.s32 %s17, %s24
      %p73 = scmp.eq.s32.totalorder %s72, 0
      %s75 = sadd.s32 %s74, 1
      %s76 = scalar_select %p73, %s74, %s75
      %p79 = pneg %p73
      %p80 = scmp.eq.s32.totalorder %s17, 2
      %p81 = por %p79, %p80
      %p82 = scmp.ne.s32.totalorder %s74, %s77
      %p83 = scmp.eq.s32.totalorder %s17, 0
      %p84 = por %p82, %p83
      %p85 = scmp.ne.s32.totalorder %s74, %s77
      %p86 = scmp.eq.s32.totalorder %s22, 2
      %p87 = por %p85, %p86
      %p88 = scmp.ne.s32.totalorder %s77, %s78
      %p89 = scmp.eq.s32.totalorder %s22, 0
      %p90 = por %p88, %p89
      %p91 = scmp.ne.s32.totalorder %s77, %s78
      %p92 = scmp.eq.s32.totalorder %s23, 2
      %p93 = por %p91, %p92
      %p95 = scmp.ne.s32.totalorder %s78, %s94
      %p96 = scmp.eq.s32.totalorder %s23, 0
      %p97 = por %p95, %p96
      %s98 = ssub.s32 %s17, %s24
      %p99 = scmp.eq.s32.totalorder %s98, 0
      %s101 = sadd.s32 %s100, 1
      %s102 = scalar_select %p99, %s100, %s101
      %p105 = pneg %p99
      %p106 = scmp.eq.s32.totalorder %s17, 2
      %p107 = por %p105, %p106
      %p108 = scmp.ne.s32.totalorder %s100, %s103
      %p109 = scmp.eq.s32.totalorder %s17, 0
      %p110 = por %p108, %p109
      %p111 = scmp.ne.s32.totalorder %s100, %s103
      %p112 = scmp.eq.s32.totalorder %s22, 2
      %p113 = por %p111, %p112
      %p114 = scmp.ne.s32.totalorder %s103, %s104
      %p115 = scmp.eq.s32.totalorder %s22, 0
      %p116 = por %p114, %p115
      %p117 = scmp.ne.s32.totalorder %s103, %s104
      %p118 = scmp.eq.s32.totalorder %s23, 2
      %p119 = por %p117, %p118
      %p121 = scmp.ne.s32.totalorder %s104, %s120
      %p122 = scmp.eq.s32.totalorder %s23, 0
      %p123 = por %p121, %p122
      %s124 = ssub.s32 %s17, %s24
      %p125 = scmp.eq.s32.totalorder %s124, 0
      %s127 = sadd.s32 %s126, 1
      %s128 = scalar_select %p125, %s126, %s127
      %p131 = pneg %p125
      %p132 = scmp.eq.s32.totalorder %s17, 2
      %p133 = por %p131, %p132
      %p134 = scmp.ne.s32.totalorder %s126, %s129
      %p135 = scmp.eq.s32.totalorder %s17, 0
      %p136 = por %p134, %p135
      %p137 = scmp.ne.s32.totalorder %s126, %s129
      %p138 = scmp.eq.s32.totalorder %s22, 2
      %p139 = por %p137, %p138
      %p140 = scmp.ne.s32.totalorder %s129, %s130
      %p141 = scmp.eq.s32.totalorder %s22, 0
      %p142 = por %p140, %p141
      %p143 = scmp.ne.s32.totalorder %s129, %s130
      %p144 = scmp.eq.s32.totalorder %s23, 2
      %p145 = por %p143, %p144
      %p147 = scmp.ne.s32.totalorder %s130, %s146
      %p148 = scmp.eq.s32.totalorder %s23, 0
      %p149 = por %p147, %p148
      %p150 = scmp.le.s32.totalorder 1, %s17
      %p151 = scmp.lt.s32.totalorder %s17, 4
      %p152 = pnand %p150, %p151
      %p153 = pneg %p152
      // Predicated region
      $region9: #{tpu_custom_call.1} parent=5 // pred_check
        _
      $region10: #{tpu_custom_call.1} parent=5 // pred_check_branch
        %155 = sbr.rel (%p152) target = $region12
      $region11: #{tpu_custom_call.1} parent=5 // pred_region
        %s156 = ssub.s32 %s17, 1
        // Predicated region
        $region13: #{tpu_custom_call.1} parent=11 // pred_check
          %p157 = pneg %p64
        $region14: #{tpu_custom_call.1} parent=11 // pred_check_branch
          %159 = sbr.rel (%p157) target = $region16
        $region15: #{tpu_custom_call.1} parent=11 // pred_region
          %s161 = ssub.s32 2048, 2048
          %162 = vsyncadd [#allocation6], %s161
          %s163 = sshll.u32 [#allocation5], 4
          %s164 = int_to_ptr.vmem [resolvable:$true] %s163
          %169 = dma.hbm_to_vmem [thread:$0]  %s1, 2048, %s164, [#allocation6], 128, 128, 8
        $region16: #{tpu_custom_call.1} parent=11 // pred_fallthru
          _
      $region12: #{tpu_custom_call.1} parent=5 // pred_fallthru
        _
      %p170 = scmp.lt.s32.totalorder %s17, 3
      // Predicated region
      $region17: #{tpu_custom_call.1} parent=5 // pred_check
        %p171 = pneg %p170
      $region18: #{tpu_custom_call.1} parent=5 // pred_check_branch
        %173 = sbr.rel (%p171) target = $region20
      $region19: #{tpu_custom_call.1} parent=5 // pred_region
        // Predicated region
        $region21: #{tpu_custom_call.1} parent=19 // pred_check
          %p174 = pneg %p37
        $region22: #{tpu_custom_call.1} parent=19 // pred_check_branch
          %176 = sbr.rel (%p174) target = $region24
        $region23: #{tpu_custom_call.1} parent=19 // pred_region
          %s177 = sand.u32 %s17, 1
          %s178 = scalar_lea.sflag [#allocation3], %s177
          %s179 = sand.u32 %s27, 1
          %s180 = smul.addr %s179, 64
          %s181 = scalar_lea.vmem [#allocation2], %s180
          %s183 = ssub.s32 1024, 1024
          %184 = vsyncadd %s178, %s183
          %s185 = smul.addr %s17, 16
          %s186 = smul.addr %s185, 64
          %s187 = scalar_lea.hbm %s0, %s186
          %s188 = sshll.u32 %s181, 4
          %s189 = int_to_ptr.vmem [resolvable:$true] %s188
          %194 = dma.hbm_to_vmem [thread:$0]  %s187, 1024, %s189, %s178, 64, 64, 4
        $region24: #{tpu_custom_call.1} parent=19 // pred_fallthru
          _
        // Predicated region
        $region25: #{tpu_custom_call.1} parent=19 // pred_check
          %p195 = pneg %p84
        $region26: #{tpu_custom_call.1} parent=19 // pred_check_branch
          %197 = sbr.rel (%p195) target = $region28
        $region27: #{tpu_custom_call.1} parent=19 // pred_region
          %s198 = sand.u32 %s17, 1
          %s199 = scalar_lea.sflag [#allocation3], %s198
          %s200 = sand.u32 %s74, 1
          %s201 = smul.addr %s200, 16
          %s202 = scalar_lea.vmem [#allocation7], %s201
          %s204 = ssub.s32 256, 256
          %205 = vsyncadd %s199, %s204
          %s206 = smul.addr %s17, 2
          %s207 = smul.addr %s206, 128
          %s208 = scalar_lea.hbm %s2, %s207
          %s209 = sshll.u32 %s202, 4
          %s210 = int_to_ptr.vmem [resolvable:$true] %s209
          %215 = dma.hbm_to_vmem [thread:$0]  %s208, 256, %s210, %s199, 128, 128, 8
        $region28: #{tpu_custom_call.1} parent=19 // pred_fallthru
          _
        // Predicated region
        $region29: #{tpu_custom_call.1} parent=19 // pred_check
          %p216 = pneg %p110
        $region30: #{tpu_custom_call.1} parent=19 // pred_check_branch
          %218 = sbr.rel (%p216) target = $region32
        $region31: #{tpu_custom_call.1} parent=19 // pred_region
          %s219 = sand.u32 %s17, 1
          %s220 = scalar_lea.sflag [#allocation3], %s219
          %s221 = sand.u32 %s100, 1
          %s222 = scalar_lea.vmem [#allocation8], %s221
          %s224 = ssub.s32 16, 16
          %225 = vsyncadd %s220, %s224
          %s226 = smul.addr %s17, 16
          %s227 = scalar_lea.hbm %s3, %s226
          %s229 = sshll.u32 %s222, 4
          %s230 = int_to_ptr.vmem [resolvable:$true] %s229
          %232 = dma.hbm_to_vmem [thread:$0]  %s227, 16, %s230, %s220
        $region32: #{tpu_custom_call.1} parent=19 // pred_fallthru
          _
      $region20: #{tpu_custom_call.1} parent=5 // pred_fallthru
        _
      %p233 = scmp.le.s32.totalorder 1, %s17
      %p234 = scmp.lt.s32.totalorder %s17, 4
      %p235 = pnand %p233, %p234
      %p236 = pneg %p235
      // Predicated region
      $region33: #{tpu_custom_call.1} parent=5 // pred_check
        _
      $region34: #{tpu_custom_call.1} parent=5 // pred_check_branch
        %238 = sbr.rel (%p235) target = $region36
      $region35: #{tpu_custom_call.1} parent=5 // pred_region
        %s239 = ssub.s32 %s17, 1
        %s240 = sand.u32 %s22, 1
        %s241 = scalar_lea.sflag [#allocation3], %s240
        %s242 = sand.u32 %s30, 1
        %s243 = smul.addr %s242, 64
        %s244 = scalar_lea.vmem [#allocation2], %s243
        // Predicated region
        $region37: #{tpu_custom_call.1} parent=35 // pred_check
          %p245 = pneg %p43
        $region38: #{tpu_custom_call.1} parent=35 // pred_check_branch
          %247 = sbr.rel (%p245) target = $region40
        $region39: #{tpu_custom_call.1} parent=35 // pred_region
          %248 = dma.done %s241, 1024
        $region40: #{tpu_custom_call.1} parent=35 // pred_fallthru
          _
        // Predicated region
        $region41: #{tpu_custom_call.1} parent=35 // pred_check
          %p249 = pneg %p64
        $region42: #{tpu_custom_call.1} parent=35 // pred_check_branch
          %251 = sbr.rel (%p249) target = $region44
        $region43: #{tpu_custom_call.1} parent=35 // pred_region
          %252 = dma.done [#allocation6], 2048
        $region44: #{tpu_custom_call.1} parent=35 // pred_fallthru
          _
        %s253 = sand.u32 %s22, 1
        %s254 = scalar_lea.sflag [#allocation3], %s253
        %s255 = sand.u32 %s77, 1
        %s256 = smul.addr %s255, 16
        %s257 = scalar_lea.vmem [#allocation7], %s256
        // Predicated region
        $region45: #{tpu_custom_call.1} parent=35 // pred_check
          %p258 = pneg %p90
        $region46: #{tpu_custom_call.1} parent=35 // pred_check_branch
          %260 = sbr.rel (%p258) target = $region48
        $region47: #{tpu_custom_call.1} parent=35 // pred_region
          %261 = dma.done %s254, 256
        $region48: #{tpu_custom_call.1} parent=35 // pred_fallthru
          _
        %s262 = sand.u32 %s22, 1
        %s263 = scalar_lea.sflag [#allocation3], %s262
        %s264 = sand.u32 %s103, 1
        %s265 = scalar_lea.vmem [#allocation8], %s264
        // Predicated region
        $region49: #{tpu_custom_call.1} parent=35 // pred_check
          %p266 = pneg %p116
        $region50: #{tpu_custom_call.1} parent=35 // pred_check_branch
          %268 = sbr.rel (%p266) target = $region52
        $region51: #{tpu_custom_call.1} parent=35 // pred_region
          %269 = dma.done %s263, 16
        $region52: #{tpu_custom_call.1} parent=35 // pred_fallthru
          _
        %s270 = sand.u32 %s22, 1
        %s271 = scalar_lea.sflag [#allocation3], %s270
        %s272 = sand.u32 %s30, 1
        %s273 = smul.addr %s272, 64
        %s274 = scalar_lea.vmem [#allocation2], %s273
        %p275 = pneg %p43
        %p276 = pneg %p40
        %p277 = pneg %p64
        %p278 = pneg %p61
        %s279 = sand.u32 %s22, 1
        %s280 = scalar_lea.sflag [#allocation3], %s279
        %s281 = sand.u32 %s77, 1
        %s282 = smul.addr %s281, 16
        %s283 = scalar_lea.vmem [#allocation7], %s282
        %p284 = pneg %p90
        %p285 = pneg %p87
        %s286 = sand.u32 %s22, 1
        %s287 = scalar_lea.sflag [#allocation3], %s286
        %s288 = sand.u32 %s103, 1
        %s289 = scalar_lea.vmem [#allocation8], %s288
        %p290 = pneg %p116
        %p291 = pneg %p113
        %p292 = pneg %p142
        %p293 = pneg %p139
        %s294 = sand.u32 %s129, 1
        %s295 = scalar_lea.sflag [#allocation4], %s294
        %s296 = sand.u32 %s129, 1
        %s297 = smul.addr %s296, 128
        %s298 = scalar_lea.vmem [#allocation9], %s297
        %v300 = vld [vmem:[%s244] sm:$0xf]
        %v301 = vld [vmem:[%s244 + $0x4] sm:$0xf]
        %v302 = vld [vmem:[%s244 + $0x8] sm:$0xf]
        %v303 = vld [vmem:[%s244 + $0xc] sm:$0xf]
        %v304 = vld [vmem:[%s244 + $0x10] sm:$0xf]
        %v305 = vld [vmem:[%s244 + $0x14] sm:$0xf]
        %v306 = vld [vmem:[%s244 + $0x18] sm:$0xf]
        %v307 = vld [vmem:[%s244 + $0x1c] sm:$0xf]
        %v308 = vld [vmem:[%s244 + $0x20] sm:$0xf]
        %v309 = vld [vmem:[%s244 + $0x24] sm:$0xf]
        %v310 = vld [vmem:[%s244 + $0x28] sm:$0xf]
        %v311 = vld [vmem:[%s244 + $0x2c] sm:$0xf]
        %v312 = vld [vmem:[%s244 + $0x30] sm:$0xf]
        %v313 = vld [vmem:[%s244 + $0x34] sm:$0xf]
        %v314 = vld [vmem:[%s244 + $0x38] sm:$0xf]
        %v315 = vld [vmem:[%s244 + $0x3c] sm:$0xf]
        %v316 = vld [vmem:[#allocation5] sm:$0xff]
        %v317 = vld [vmem:[#allocation5 + $0x8] sm:$0xff]
        %v318 = vld [vmem:[#allocation5 + $0x10] sm:$0xff]
        %v319 = vld [vmem:[#allocation5 + $0x18] sm:$0xff]
        %v320 = vld [vmem:[#allocation5 + $0x20] sm:$0xff]
        %v321 = vld [vmem:[#allocation5 + $0x28] sm:$0xff]
        %v322 = vld [vmem:[#allocation5 + $0x30] sm:$0xff]
        %v323 = vld [vmem:[#allocation5 + $0x38] sm:$0xff]
        %v324 = vld [vmem:[#allocation5 + $0x40] sm:$0xff]
        %v325 = vld [vmem:[#allocation5 + $0x48] sm:$0xff]
        %v326 = vld [vmem:[#allocation5 + $0x50] sm:$0xff]
        %v327 = vld [vmem:[#allocation5 + $0x58] sm:$0xff]
        %v328 = vld [vmem:[#allocation5 + $0x60] sm:$0xff]
        %v329 = vld [vmem:[#allocation5 + $0x68] sm:$0xff]
        %v330 = vld [vmem:[#allocation5 + $0x70] sm:$0xff]
        %v331 = vld [vmem:[#allocation5 + $0x78] sm:$0xff]
        %v332 = vpack.c.bf16 %v317, %v316
        %v333 = vpack.c.bf16 %v319, %v318
        %v334 = vpack.c.bf16 %v321, %v320
        %v335 = vpack.c.bf16 %v323, %v322
        %v336 = vpack.c.bf16 %v325, %v324
        %v337 = vpack.c.bf16 %v327, %v326
        %v338 = vpack.c.bf16 %v329, %v328
        %v339 = vpack.c.bf16 %v331, %v330
        %v340 = vld [vmem:[%s257] sm:$0xff]
        %v341 = vld [vmem:[%s257 + $0x8] sm:$0xff]
        %v342 = vpack.c.bf16 %v341, %v340
        %v343 = vld [vmem:[%s265] sm:$0x1]
        %vm344 = vcmask 130048
        %v346 = vsel %vm344, %v332, 0
        %v349 = vsel %vm344, %v333, 0
        %v352 = vsel %vm344, %v334, 0
        %v355 = vsel %vm344, %v335, 0
        %v358 = vsel %vm344, %v336, 0
        %v361 = vsel %vm344, %v337, 0
        %v364 = vsel %vm344, %v338, 0
        %v367 = vsel %vm344, %v339, 0
        %369 = vmatprep.subr.bf16.mxu0 0
        %370 = vmatpush1.bf16.msra.mxu0 %v342
        %371 = vmatprep.subr.bf16.mxu0 0
        %372 = vmatpush1.bf16.msra.mxu0 0
        %373 = vmatprep.subr.bf16.mxu0 0
        %374 = vmatpush1.bf16.msra.mxu0 0
        %375 = vmatprep.subr.bf16.mxu0 0
        %376 = vmatpush1.bf16.msra.mxu0 0
        %377 = vmatprep.subr.bf16.mxu0 0
        %378 = vmatpush1.bf16.msra.mxu0 0
        %379 = vmatprep.subr.bf16.mxu0 0
        %380 = vmatpush1.bf16.msra.mxu0 0
        %381 = vmatprep.subr.bf16.mxu0 0
        %382 = vmatpush1.bf16.msra.mxu0 0
        %383 = vmatprep.subr.bf16.mxu0 0
        %384 = vmatpush1.bf16.msra.mxu0 0
        %385 = vmatprep.subr.bf16.mxu0 0
        %386 = vmatpush1.bf16.msra.mxu0 0
        %387 = vmatprep.subr.bf16.mxu0 0
        %388 = vmatpush1.bf16.msra.mxu0 0
        %389 = vmatprep.subr.bf16.mxu0 0
        %390 = vmatpush1.bf16.msra.mxu0 0
        %391 = vmatprep.subr.bf16.mxu0 0
        %392 = vmatpush1.bf16.msra.mxu0 0
        %393 = vmatprep.subr.bf16.mxu0 0
        %394 = vmatpush1.bf16.msra.mxu0 0
        %395 = vmatprep.subr.bf16.mxu0 0
        %396 = vmatpush1.bf16.msra.mxu0 0
        %397 = vmatprep.subr.bf16.mxu0 0
        %398 = vmatpush1.bf16.msra.mxu0 0
        %399 = vmatprep.subr.bf16.mxu0 0
        %400 = vmatpush1.bf16.msra.mxu0 0
        %401 = vmatprep.mubr.bf16.mxu0 0
        %402 = vmatmul.mubr.bf16.gmra.mrb[0].mxu0 %v346
        %v403 = vpop.f32.mrb[0].mxu0
        %v404 = vadd.f32 0.0, %v403
        %v405 = vpop.f32.mrb[0].mxu0
        %v406 = vpop.f32.mrb[0].mxu0
        %v407 = vadd.f32 0.0, %v406
        %v408 = vpop.f32.mrb[0].mxu0
        %409 = vmatprep.mubr.bf16.mxu0 0
        %410 = vmatmul.mubr.bf16.gmra.mrb[0].mxu0 %v349
        %v411 = vpop.f32.mrb[0].mxu0
        %v412 = vadd.f32 0.0, %v411
        %v413 = vpop.f32.mrb[0].mxu0
        %v414 = vpop.f32.mrb[0].mxu0
        %v415 = vadd.f32 0.0, %v414
        %v416 = vpop.f32.mrb[0].mxu0
        %417 = vmatprep.mubr.bf16.mxu0 0
        %418 = vmatmul.mubr.bf16.gmra.mrb[0].mxu0 %v352
        %v419 = vpop.f32.mrb[0].mxu0
        %v420 = vadd.f32 0.0, %v419
        %v421 = vpop.f32.mrb[0].mxu0
        %v422 = vpop.f32.mrb[0].mxu0
        %v423 = vadd.f32 0.0, %v422
        %v424 = vpop.f32.mrb[0].mxu0
        %425 = vmatprep.mubr.bf16.mxu0 0
        %426 = vmatmul.mubr.bf16.gmra.mrb[0].mxu0 %v355
        %v427 = vpop.f32.mrb[0].mxu0
        %v428 = vadd.f32 0.0, %v427
        %v429 = vpop.f32.mrb[0].mxu0
        %v430 = vpop.f32.mrb[0].mxu0
        %v431 = vadd.f32 0.0, %v430
        %v432 = vpop.f32.mrb[0].mxu0
        %433 = vmatprep.mubr.bf16.mxu0 0
        %434 = vmatmul.mubr.bf16.gmra.mrb[0].mxu0 %v358
        %v435 = vpop.f32.mrb[0].mxu0
        %v436 = vadd.f32 0.0, %v435
        %v437 = vpop.f32.mrb[0].mxu0
        %v438 = vpop.f32.mrb[0].mxu0
        %v439 = vadd.f32 0.0, %v438
        %v440 = vpop.f32.mrb[0].mxu0
        %441 = vmatprep.mubr.bf16.mxu0 0
        %442 = vmatmul.mubr.bf16.gmra.mrb[0].mxu0 %v361
        %v443 = vpop.f32.mrb[0].mxu0
        %v444 = vadd.f32 0.0, %v443
        %v445 = vpop.f32.mrb[0].mxu0
        %v446 = vpop.f32.mrb[0].mxu0
        %v447 = vadd.f32 0.0, %v446
        %v448 = vpop.f32.mrb[0].mxu0
        %449 = vmatprep.mubr.bf16.mxu0 0
        %450 = vmatmul.mubr.bf16.gmra.mrb[0].mxu0 %v364
        %v451 = vpop.f32.mrb[0].mxu0
        %v452 = vadd.f32 0.0, %v451
        %v453 = vpop.f32.mrb[0].mxu0
        %v454 = vpop.f32.mrb[0].mxu0
        %v455 = vadd.f32 0.0, %v454
        %v456 = vpop.f32.mrb[0].mxu0
        %457 = vmatprep.mubr.bf16.mxu0 0
        %458 = vmatmul.mubr.bf16.gmra.mrb[0].mxu0 %v367
        %v459 = vpop.f32.mrb[0].mxu0
        %v460 = vadd.f32 0.0, %v459
        %v461 = vpop.f32.mrb[0].mxu0
        %v462 = vpop.f32.mrb[0].mxu0
        %v463 = vadd.f32 0.0, %v462
        %v464 = vpop.f32.mrb[0].mxu0
        %465 = vdwg.mxu0
        %v466 = vpack.c.bf16 %v407, %v404
        %v467 = vpack.c.bf16 %v415, %v412
        %v468 = vpack.c.bf16 %v423, %v420
        %v469 = vpack.c.bf16 %v431, %v428
        %v470 = vpack.c.bf16 %v439, %v436
        %v471 = vpack.c.bf16 %v447, %v444
        %v472 = vpack.c.bf16 %v455, %v452
        %v473 = vpack.c.bf16 %v463, %v460
        %v475 = vlaneseq
        %v476 = vshrl.u32 %v475, 7
        %v477 = vsub.s32 0, %v476
        %v478 = vrot.slane %v343, %v477
        %v496 = vunpack.c.l.b16 %v300
        %v497 = vunpack.c.l.b16 %v301
        %v498 = vunpack.c.l.b16 %v302
        %v499 = vunpack.c.l.b16 %v303
        %v500 = vunpack.c.l.b16 %v304
        %v501 = vunpack.c.l.b16 %v305
        %v502 = vunpack.c.l.b16 %v306
        %v503 = vunpack.c.l.b16 %v307
        %v504 = vunpack.c.l.b16 %v308
        %v505 = vunpack.c.l.b16 %v309
        %v506 = vunpack.c.l.b16 %v310
        %v507 = vunpack.c.l.b16 %v311
        %v508 = vunpack.c.l.b16 %v312
        %v509 = vunpack.c.l.b16 %v313
        %v510 = vunpack.c.l.b16 %v314
        %v511 = vunpack.c.l.b16 %v315
        %v512 = vpack.c.b16 %v497, %v496
        %v513 = vpack.c.b16 %v499, %v498
        %v514 = vpack.c.b16 %v501, %v500
        %v515 = vpack.c.b16 %v503, %v502
        %v516 = vpack.c.b16 %v505, %v504
        %v517 = vpack.c.b16 %v507, %v506
        %v518 = vpack.c.b16 %v509, %v508
        %v519 = vpack.c.b16 %v511, %v510
        %528 = vxpose.xlu0.c.b16.start [1/8] %v512, 128
        %529 = vxpose.xlu0.c.b16.cont [2/8] %v513, 128
        %530 = vxpose.xlu0.c.b16.cont [3/8] %v514, 128
        %531 = vxpose.xlu0.c.b16.cont [4/8] %v515, 128
        %532 = vxpose.xlu0.c.b16.cont [5/8] %v516, 128
        %533 = vxpose.xlu0.c.b16.cont [6/8] %v517, 128
        %534 = vxpose.xlu0.c.b16.cont [7/8] %v518, 128
        %535 = vxpose.xlu0.c.b16.end [8/8] %v519, 128
        %v536 = vpop.trf.xlu0
        %v537 = vpop.trf.xlu0
        %v538 = vpop.trf.xlu0
        %v539 = vpop.trf.xlu0
        %v540 = vpop.trf.xlu0
        %v541 = vpop.trf.xlu0
        %v542 = vpop.trf.xlu0
        %v543 = vpop.trf.xlu0
        %544 = vmatprep.subr.bf16.mxu0 0
        %545 = vmatpush1.bf16.msra.mxu0 %v466
        %546 = vmatprep.subr.bf16.mxu0 0
        %547 = vmatpush1.bf16.msra.mxu0 %v467
        %548 = vmatprep.subr.bf16.mxu0 0
        %549 = vmatpush1.bf16.msra.mxu0 %v468
        %550 = vmatprep.subr.bf16.mxu0 0
        %551 = vmatpush1.bf16.msra.mxu0 %v469
        %552 = vmatprep.subr.bf16.mxu0 0
        %553 = vmatpush1.bf16.msra.mxu0 %v470
        %554 = vmatprep.subr.bf16.mxu0 0
        %555 = vmatpush1.bf16.msra.mxu0 %v471
        %556 = vmatprep.subr.bf16.mxu0 0
        %557 = vmatpush1.bf16.msra.mxu0 %v472
        %558 = vmatprep.subr.bf16.mxu0 0
        %559 = vmatpush1.bf16.msra.mxu0 %v473
        %560 = vmatprep.subr.bf16.mxu0 0
        %561 = vmatpush1.bf16.msra.mxu0 0
        %562 = vmatprep.subr.bf16.mxu0 0
        %563 = vmatpush1.bf16.msra.mxu0 0
        %564 = vmatprep.subr.bf16.mxu0 0
        %565 = vmatpush1.bf16.msra.mxu0 0
        %566 = vmatprep.subr.bf16.mxu0 0
        %567 = vmatpush1.bf16.msra.mxu0 0
        %568 = vmatprep.subr.bf16.mxu0 0
        %569 = vmatpush1.bf16.msra.mxu0 0
        %570 = vmatprep.subr.bf16.mxu0 0
        %571 = vmatpush1.bf16.msra.mxu0 0
        %572 = vmatprep.subr.bf16.mxu0 0
        %573 = vmatpush1.bf16.msra.mxu0 0
        %574 = vmatprep.subr.bf16.mxu0 0
        %575 = vmatpush1.bf16.msra.mxu0 0
        %576 = vmatprep.mubr.bf16.mxu0 0
        %577 = vmatmul.mubr.bf16.gmra.mrb[0].mxu0 %v536
        %v578 = vpop.f32.mrb[0].mxu0
        %v579 = vadd.f32 %v478, %v578
        %v580 = vpop.f32.mrb[0].mxu0
        %v581 = vpop.f32.mrb[0].mxu0
        %v582 = vadd.f32 %v478, %v581
        %v583 = vpop.f32.mrb[0].mxu0
        %584 = vmatprep.mubr.bf16.mxu0 0
        %585 = vmatmul.mubr.bf16.gmra.mrb[0].mxu0 %v537
        %v586 = vpop.f32.mrb[0].mxu0
        %v587 = vadd.f32 %v478, %v586
        %v588 = vpop.f32.mrb[0].mxu0
        %v589 = vpop.f32.mrb[0].mxu0
        %v590 = vadd.f32 %v478, %v589
        %v591 = vpop.f32.mrb[0].mxu0
        %592 = vmatprep.mubr.bf16.mxu0 0
        %593 = vmatmul.mubr.bf16.gmra.mrb[0].mxu0 %v538
        %v594 = vpop.f32.mrb[0].mxu0
        %v595 = vadd.f32 %v478, %v594
        %v596 = vpop.f32.mrb[0].mxu0
        %v597 = vpop.f32.mrb[0].mxu0
        %v598 = vadd.f32 %v478, %v597
        %v599 = vpop.f32.mrb[0].mxu0
        %600 = vmatprep.mubr.bf16.mxu0 0
        %601 = vmatmul.mubr.bf16.gmra.mrb[0].mxu0 %v539
        %v602 = vpop.f32.mrb[0].mxu0
        %v603 = vadd.f32 %v478, %v602
        %v604 = vpop.f32.mrb[0].mxu0
        %v605 = vpop.f32.mrb[0].mxu0
        %v606 = vadd.f32 %v478, %v605
        %v607 = vpop.f32.mrb[0].mxu0
        %608 = vmatprep.mubr.bf16.mxu0 0
        %609 = vmatmul.mubr.bf16.gmra.mrb[0].mxu0 %v540
        %v610 = vpop.f32.mrb[0].mxu0
        %v611 = vadd.f32 %v478, %v610
        %v612 = vpop.f32.mrb[0].mxu0
        %v613 = vpop.f32.mrb[0].mxu0
        %v614 = vadd.f32 %v478, %v613
        %v615 = vpop.f32.mrb[0].mxu0
        %616 = vmatprep.mubr.bf16.mxu0 0
        %617 = vmatmul.mubr.bf16.gmra.mrb[0].mxu0 %v541
        %v618 = vpop.f32.mrb[0].mxu0
        %v619 = vadd.f32 %v478, %v618
        %v620 = vpop.f32.mrb[0].mxu0
        %v621 = vpop.f32.mrb[0].mxu0
        %v622 = vadd.f32 %v478, %v621
        %v623 = vpop.f32.mrb[0].mxu0
        %624 = vmatprep.mubr.bf16.mxu0 0
        %625 = vmatmul.mubr.bf16.gmra.mrb[0].mxu0 %v542
        %v626 = vpop.f32.mrb[0].mxu0
        %v627 = vadd.f32 %v478, %v626
        %v628 = vpop.f32.mrb[0].mxu0
        %v629 = vpop.f32.mrb[0].mxu0
        %v630 = vadd.f32 %v478, %v629
        %v631 = vpop.f32.mrb[0].mxu0
        %632 = vmatprep.mubr.bf16.mxu0 0
        %633 = vmatmul.mubr.bf16.gmra.mrb[0].mxu0 %v543
        %v634 = vpop.f32.mrb[0].mxu0
        %v635 = vadd.f32 %v478, %v634
        %v636 = vpop.f32.mrb[0].mxu0
        %v637 = vpop.f32.mrb[0].mxu0
        %v638 = vadd.f32 %v478, %v637
        %v639 = vpop.f32.mrb[0].mxu0
        %640 = vdwg.mxu0
        %vm641 = vcmask 64512
        %v642 = vsel %vm641, %v579, 0.0
        %v643 = vsel %vm641, %v582, 0.0
        %v644 = vadd.f32 %v642, %v643
        %v645 = vsel %vm641, %v587, 0.0
        %v646 = vadd.f32 %v644, %v645
        %v647 = vsel %vm641, %v590, 0.0
        %v648 = vadd.f32 %v646, %v647
        %v649 = vsel %vm641, %v595, 0.0
        %v650 = vadd.f32 %v648, %v649
        %v651 = vsel %vm641, %v598, 0.0
        %v652 = vadd.f32 %v650, %v651
        %v653 = vsel %vm641, %v603, 0.0
        %v654 = vadd.f32 %v652, %v653
        %v655 = vsel %vm641, %v606, 0.0
        %v656 = vadd.f32 %v654, %v655
        %v657 = vsel %vm641, %v611, 0.0
        %v658 = vadd.f32 %v656, %v657
        %v659 = vsel %vm641, %v614, 0.0
        %v660 = vadd.f32 %v658, %v659
        %v661 = vsel %vm641, %v619, 0.0
        %v662 = vadd.f32 %v660, %v661
        %v663 = vsel %vm641, %v622, 0.0
        %v664 = vadd.f32 %v662, %v663
        %v665 = vsel %vm641, %v627, 0.0
        %v666 = vadd.f32 %v664, %v665
        %v667 = vsel %vm641, %v630, 0.0
        %v668 = vadd.f32 %v666, %v667
        %v669 = vsel %vm641, %v635, 0.0
        %v670 = vadd.f32 %v668, %v669
        %v671 = vsel %vm641, %v638, 0.0
        %v672 = vadd.f32 %v670, %v671
        %v673 = vrot.slane %v672, 4
        %v674 = vadd.f32 %v672, %v673
        %v675 = vrot.slane %v674, 2
        %v676 = vadd.f32 %v674, %v675
        %v677 = vrot.slane %v676, 1
        %v678 = vadd.f32 %v676, %v677
        %v679 = vrcp.pop 128.0
        %v680 = vmul.f32 %v678, %v679
        %v681 = vsub.f32 %v579, %v680
        %v682 = vsub.f32 %v582, %v680
        %v683 = vsub.f32 %v587, %v680
        %v684 = vsub.f32 %v590, %v680
        %v685 = vsub.f32 %v595, %v680
        %v686 = vsub.f32 %v598, %v680
        %v687 = vsub.f32 %v603, %v680
        %v688 = vsub.f32 %v606, %v680
        %v689 = vsub.f32 %v611, %v680
        %v690 = vsub.f32 %v614, %v680
        %v691 = vsub.f32 %v619, %v680
        %v692 = vsub.f32 %v622, %v680
        %v693 = vsub.f32 %v627, %v680
        %v694 = vsub.f32 %v630, %v680
        %v695 = vsub.f32 %v635, %v680
        %v696 = vsub.f32 %v638, %v680
        %v697 = vmul.f32 %v681, %v681
        %v698 = vmul.f32 %v682, %v682
        %v699 = vmul.f32 %v683, %v683
        %v700 = vmul.f32 %v684, %v684
        %v701 = vmul.f32 %v685, %v685
        %v702 = vmul.f32 %v686, %v686
        %v703 = vmul.f32 %v687, %v687
        %v704 = vmul.f32 %v688, %v688
        %v705 = vmul.f32 %v689, %v689
        %v706 = vmul.f32 %v690, %v690
        %v707 = vmul.f32 %v691, %v691
        %v708 = vmul.f32 %v692, %v692
        %v709 = vmul.f32 %v693, %v693
        %v710 = vmul.f32 %v694, %v694
        %v711 = vmul.f32 %v695, %v695
        %v712 = vmul.f32 %v696, %v696
        %v713 = vsel %vm641, %v697, 0.0
        %v714 = vsel %vm641, %v698, 0.0
        %v715 = vadd.f32 %v713, %v714
        %v716 = vsel %vm641, %v699, 0.0
        %v717 = vadd.f32 %v715, %v716
        %v718 = vsel %vm641, %v700, 0.0
        %v719 = vadd.f32 %v717, %v718
        %v720 = vsel %vm641, %v701, 0.0
        %v721 = vadd.f32 %v719, %v720
        %v722 = vsel %vm641, %v702, 0.0
        %v723 = vadd.f32 %v721, %v722
        %v724 = vsel %vm641, %v703, 0.0
        %v725 = vadd.f32 %v723, %v724
        %v726 = vsel %vm641, %v704, 0.0
        %v727 = vadd.f32 %v725, %v726
        %v728 = vsel %vm641, %v705, 0.0
        %v729 = vadd.f32 %v727, %v728
        %v730 = vsel %vm641, %v706, 0.0
        %v731 = vadd.f32 %v729, %v730
        %v732 = vsel %vm641, %v707, 0.0
        %v733 = vadd.f32 %v731, %v732
        %v734 = vsel %vm641, %v708, 0.0
        %v735 = vadd.f32 %v733, %v734
        %v736 = vsel %vm641, %v709, 0.0
        %v737 = vadd.f32 %v735, %v736
        %v738 = vsel %vm641, %v710, 0.0
        %v739 = vadd.f32 %v737, %v738
        %v740 = vsel %vm641, %v711, 0.0
        %v741 = vadd.f32 %v739, %v740
        %v742 = vsel %vm641, %v712, 0.0
        %v743 = vadd.f32 %v741, %v742
        %v744 = vrot.slane %v743, 4
        %v745 = vadd.f32 %v743, %v744
        %v746 = vrot.slane %v745, 2
        %v747 = vadd.f32 %v745, %v746
        %v748 = vrot.slane %v747, 1
        %v749 = vadd.f32 %v747, %v748
        %v750 = vmul.f32 %v749, %v679
        %v751 = vadd.f32 %v750, 1e-05
        %v752 = vrsqrt.pop %v751
        %v753 = vmul.f32 %v681, %v752
        %v754 = vmul.f32 %v682, %v752
        %v755 = vmul.f32 %v683, %v752
        %v756 = vmul.f32 %v684, %v752
        %v757 = vmul.f32 %v685, %v752
        %v758 = vmul.f32 %v686, %v752
        %v759 = vmul.f32 %v687, %v752
        %v760 = vmul.f32 %v688, %v752
        %v761 = vmul.f32 %v689, %v752
        %v762 = vmul.f32 %v690, %v752
        %v763 = vmul.f32 %v691, %v752
        %v764 = vmul.f32 %v692, %v752
        %v765 = vmul.f32 %v693, %v752
        %v766 = vmul.f32 %v694, %v752
        %v767 = vmul.f32 %v695, %v752
        %v768 = vmul.f32 %v696, %v752
        %v769 = vmax.f32 %v753, 0.0
        %v770 = vmax.f32 %v754, 0.0
        %v771 = vmax.f32 %v755, 0.0
        %v772 = vmax.f32 %v756, 0.0
        %v773 = vmax.f32 %v757, 0.0
        %v774 = vmax.f32 %v758, 0.0
        %v775 = vmax.f32 %v759, 0.0
        %v776 = vmax.f32 %v760, 0.0
        %v777 = vmax.f32 %v761, 0.0
        %v778 = vmax.f32 %v762, 0.0
        %v779 = vmax.f32 %v763, 0.0
        %v780 = vmax.f32 %v764, 0.0
        %v781 = vmax.f32 %v765, 0.0
        %v782 = vmax.f32 %v766, 0.0
        %v783 = vmax.f32 %v767, 0.0
        %v784 = vmax.f32 %v768, 0.0
        %785 = vst.msk [vmem:[%s298] sm:$0xff] %vm641, %v769
        %786 = vst.msk [vmem:[%s298 + $0x8] sm:$0xff] %vm641, %v770
        %787 = vst.msk [vmem:[%s298 + $0x10] sm:$0xff] %vm641, %v771
        %788 = vst.msk [vmem:[%s298 + $0x18] sm:$0xff] %vm641, %v772
        %789 = vst.msk [vmem:[%s298 + $0x20] sm:$0xff] %vm641, %v773
        %790 = vst.msk [vmem:[%s298 + $0x28] sm:$0xff] %vm641, %v774
        %791 = vst.msk [vmem:[%s298 + $0x30] sm:$0xff] %vm641, %v775
        %792 = vst.msk [vmem:[%s298 + $0x38] sm:$0xff] %vm641, %v776
        %793 = vst.msk [vmem:[%s298 + $0x40] sm:$0xff] %vm641, %v777
        %794 = vst.msk [vmem:[%s298 + $0x48] sm:$0xff] %vm641, %v778
        %795 = vst.msk [vmem:[%s298 + $0x50] sm:$0xff] %vm641, %v779
        %796 = vst.msk [vmem:[%s298 + $0x58] sm:$0xff] %vm641, %v780
        %797 = vst.msk [vmem:[%s298 + $0x60] sm:$0xff] %vm641, %v781
        %798 = vst.msk [vmem:[%s298 + $0x68] sm:$0xff] %vm641, %v782
        %799 = vst.msk [vmem:[%s298 + $0x70] sm:$0xff] %vm641, %v783
        %800 = vst.msk [vmem:[%s298 + $0x78] sm:$0xff] %vm641, %v784
        %s801 = sand.u32 %s129, 1
        %s802 = scalar_lea.sflag [#allocation4], %s801
        %s803 = sand.u32 %s129, 1
        %s804 = smul.addr %s803, 128
        %s805 = scalar_lea.vmem [#allocation9], %s804
        // Predicated region
        $region53: #{tpu_custom_call.1} parent=35 // pred_check
          %p806 = pneg %p139
        $region54: #{tpu_custom_call.1} parent=35 // pred_check_branch
          %808 = sbr.rel (%p806) target = $region56
        $region55: #{tpu_custom_call.1} parent=35 // pred_region
          %s810 = ssub.s32 2048, 2048
          %811 = vsyncadd %s802, %s810
          %s812 = smul.addr %s22, 16
          %s813 = smul.addr %s812, 128
          %s814 = scalar_lea.hbm %s4, %s813
          %s815 = sshll.u32 %s805, 4
          %s816 = int_to_ptr.vmem [resolvable:$true] %s815
          %821 = dma.vmem_to_hbm [thread:$0]  %s816, 2048, %s814, %s802, 128, 128, 8
        $region56: #{tpu_custom_call.1} parent=35 // pred_fallthru
          _
      $region36: #{tpu_custom_call.1} parent=5 // pred_fallthru
        _
      %p822 = scmp.le.s32.totalorder 2, %s17
      // Predicated region
      $region57: #{tpu_custom_call.1} parent=5 // pred_check
        %p823 = pneg %p822
      $region58: #{tpu_custom_call.1} parent=5 // pred_check_branch
        %825 = sbr.rel (%p823) target = $region60
      $region59: #{tpu_custom_call.1} parent=5 // pred_region
        %s826 = ssub.s32 %s17, 2
        // Predicated region
        $region61: #{tpu_custom_call.1} parent=59 // pred_check
          %p827 = pneg %p145
        $region62: #{tpu_custom_call.1} parent=59 // pred_check_branch
          %829 = sbr.rel (%p827) target = $region64
        $region63: #{tpu_custom_call.1} parent=59 // pred_region
          %s830 = sand.u32 %s130, 1
          %s831 = scalar_lea.sflag [#allocation4], %s830
          %s832 = sand.u32 %s130, 1
          %s833 = smul.addr %s832, 128
          %s834 = scalar_lea.vmem [#allocation9], %s833
          %835 = dma.done %s831, 2048
        $region64: #{tpu_custom_call.1} parent=59 // pred_fallthru
          _
      $region60: #{tpu_custom_call.1} parent=5 // pred_fallthru
        _
    $region6: #{tpu_custom_call.1} parent=1 // loop_footer
      %s21 = sadd.s32 1, %s17
    $region7: #{tpu_custom_call.1} parent=1 // loop_footer_branch
      %16 = sbr.rel target = $region3
    $region8: #{tpu_custom_call.1} parent=1 // loop_exit
      _
    %836 = vsyncpa [#allocation3], 1
    %s837 = scalar_lea.sflag [#allocation3], 1
    %838 = vsyncpa %s837, 1
    %839 = vsyncpa [#allocation6], 1
    %840 = vsyncpa [#allocation4], 1
    %s841 = scalar_lea.sflag [#allocation4], 1
    %842 = vsyncpa %s841, 1

</llo_original>
